<compile_context>
chip_gen: v5e
topology: v5e:2x2
jax: 0.10.0
libtpu: 0.0.40
codegen_flags: <defaults>
</compile_context>

<pallas_src>
import math
import functools

import jax
import jax.numpy as jnp
from jax import lax
from jax.experimental import pallas as pl
from jax.experimental.pallas import tpu as pltpu

NEG_INF = float("-inf")
_LANE = 128
_TQ_CAP = 2048   # per-step q-tile cap
_TK_CAP = 1024   # per-step kv-tile cap


def _round_up(x, m):
    return (x + m - 1) // m * m


@functools.lru_cache(maxsize=None)
def _vmem_capacity_bytes():
    """Per-core VMEM capacity (generation-aware: 128 MiB v5e/v6e, 64 MiB v7x)."""
    try:
        return int(pltpu.get_tpu_info().vmem_capacity_bytes)
    except Exception:
        return 64 * 1024 * 1024  # conservative fallback


def _vmem_limit_bytes():
    return int(_vmem_capacity_bytes() * 0.85)


def _tile_budget_bytes():
    # Leave headroom for Mosaic-internal scratch beyond our own estimate.
    return int(_vmem_capacity_bytes() * 0.60)


@functools.lru_cache(maxsize=None)
def _supports_bf16_eup():
    """bf16 EUP/VPU datapath exists on v6e/v7x but not v2-v5."""
    try:
        kind = jax.devices()[0].device_kind.lower()
    except Exception:
        return False
    return not any(v in kind for v in ("v2", "v3", "v4", "v5"))


def _tile_candidates(dim_p, cap):
    """Descending 128-multiples that divide dim_p (dim_p is a 128-multiple)."""
    cand = [t for t in range(_LANE, min(dim_p, cap) + 1, _LANE) if dim_p % t == 0]
    return sorted(cand, reverse=True) or [_LANE]


def _flash_vmem_bytes(tq, tk, d_model, d_qk, d_v, c_item):
    """Approximate VMEM footprint of one flash step (lane/sublane padded)."""
    dm_l = _round_up(d_model, _LANE)
    dqk_l = _round_up(d_qk, _LANE)
    dv_l = _round_up(d_v, _LANE)
    b = 0
    b += 2 * tq * tk                                   # int8 mask (double-buffered)
    b += 2 * tq * dm_l * c_item                        # x_q tile
    b += 2 * _round_up(d_model, 8) * dqk_l * c_item    # resident wq
    b += 2 * tk * dqk_l * c_item                       # k tile
    b += 2 * tk * dv_l * c_item                        # v tile
    b += 2 * tq * dv_l * c_item                        # out tile
    b += tq * (dqk_l + dv_l + 2 * _LANE) * 4           # scratch: q, acc, m, l
    b += 3 * tq * tk * 4                               # f32 score/prob temporaries
    return b


def _pick_flash_tiles(n, s_q_p, s_kv_p, d_model, d_qk, d_v, c_item, budget):
    """Largest (tq, tk) that fits the budget; prefer >=2 (b, qi) programs (v7x)."""
    best = None
    for tq in _tile_candidates(s_q_p, _TQ_CAP):
        for tk in _tile_candidates(s_kv_p, _TK_CAP):
            if _flash_vmem_bytes(tq, tk, d_model, d_qk, d_v, c_item) <= budget:
                if best is None:
                    best = (tq, tk)
                if n * (s_q_p // tq) >= 2:
                    return tq, tk
                break  # try a smaller tq so both TensorCores get work
    return best if best is not None else (_LANE, _LANE)


def _proj_vmem_bytes(ts, d_model, d1, d2, c_item):
    dm_l = _round_up(d_model, _LANE)
    d1_l = _round_up(d1, _LANE)
    d2_l = _round_up(d2, _LANE)
    b = 2 * ts * (dm_l + d1_l + d2_l) * c_item
    b += 2 * _round_up(d_model, 8) * (d1_l + d2_l) * c_item
    return b


def _pick_proj_tile(s_p, d_model, d1, d2, c_item, budget):
    for ts in _tile_candidates(s_p, _TK_CAP):
        if _proj_vmem_bytes(ts, d_model, d1, d2, c_item) <= budget:
            return ts
    return _LANE


# --------------------------------------------------------------------------
# K/V projection kernel (hoisted: computed exactly once)
# --------------------------------------------------------------------------
def _kv_proj_kernel(x_ref, wk_ref, wv_ref, k_ref, v_ref):
    x = x_ref[0]  # (ts, d_model) in compute dtype -> MXU fast path
    k_ref[0] = jnp.dot(x, wk_ref[...],
                       preferred_element_type=jnp.float32).astype(k_ref.dtype)
    v_ref[0] = jnp.dot(x, wv_ref[...],
                       preferred_element_type=jnp.float32).astype(v_ref.dtype)


# --------------------------------------------------------------------------
# Flash attention kernel with fused Q projection + online softmax
# --------------------------------------------------------------------------
def _flash_kernel(mask_ref, xq_ref, wq_ref, k_ref, v_ref, o_ref,
                  q_sc, m_sc, l_sc, acc_sc, *, scale, exp_bf16):
    kv = pl.program_id(2)

    @pl.when(kv == 0)
    def _():
        # Fused Q projection: runs once per (batch, q-tile); wq stays resident.
        # 1/sqrt(d_qk) is folded in here: O(tq*d_qk) mults, not O(tq*tk).
        q = jnp.dot(xq_ref[0], wq_ref[...], preferred_element_type=jnp.float32)
        q_sc[...] = (q * scale).astype(q_sc.dtype)
        m_sc[...] = jnp.full(m_sc.shape, NEG_INF, jnp.float32)
        l_sc[...] = jnp.zeros(l_sc.shape, jnp.float32)
        acc_sc[...] = jnp.zeros(acc_sc.shape, jnp.float32)

    q = q_sc[...]   # (tq, d_qk) compute dtype, already scaled
    k = k_ref[0]    # (tk, d_qk)
    v = v_ref[0]    # (tk, d_v)

    # q @ k^T without materializing a transpose: contract the last dims.
    s = lax.dot_general(q, k, dimension_numbers=(((1,), (1,)), ((), ())),
                        preferred_element_type=jnp.float32)          # (tq, tk)
    s = jnp.where(mask_ref[0] != 0, s, NEG_INF)

    m_prev = m_sc[...]
    m_new = jnp.maximum(m_prev, jnp.max(s, axis=-1, keepdims=True))
    # Guard fully-masked prefixes: avoids exp(-inf - -inf) = NaN while keeping
    # exact reference semantics for rows with at least one allowed key.
    m_safe = jnp.where(m_new == NEG_INF, 0.0, m_new)
    alpha = jnp.exp(m_prev - m_safe)
    if exp_bf16:
        # v6e/v7x: bf16 EUP throughput ~2x; gated (changes numerics slightly).
        p = jnp.exp((s - m_safe).astype(jnp.bfloat16))
    else:
        p = jnp.exp(s - m_safe)

    l_sc[...] = alpha * l_sc[...] + jnp.sum(p.astype(jnp.float32),
                                            axis=-1, keepdims=True)
    acc_sc[...] = alpha * acc_sc[...] + jnp.dot(
        p.astype(v.dtype), v, preferred_element_type=jnp.float32)
    m_sc[...] = m_new

    @pl.when(kv == pl.num_programs(2) - 1)
    def _():
        # Deferred normalization: one O(tq*d_v) multiply at the end.
        inv_l = pl.reciprocal(l_sc[...], approx=False)
        o_ref[0] = (acc_sc[...] * inv_l).astype(o_ref.dtype)


# --------------------------------------------------------------------------
# Wrapper mirroring ScaledDotProductAttention.forward
# --------------------------------------------------------------------------
def scaled_dot_product_attention(mask, x_key_value, wk, wq, wv, x_query=None,
                                 *, compute_dtype=None):
    if x_query is None:
        x_query = x_key_value

    n, s_kv, d_model = x_key_value.shape
    _, s_q, _ = x_query.shape
    d_qk = wk.shape[1]
    d_v = wv.shape[1]
    out_dtype = x_key_value.dtype
    cdtype = jnp.dtype(compute_dtype) if compute_dtype is not None else jnp.dtype(out_dtype)
    c_item = cdtype.itemsize
    scale = 1.0 / math.sqrt(d_qk)

    vmem_limit = _vmem_limit_bytes()
    budget = _tile_budget_bytes()

    # Pad sequences to multiples of 128 so all blocks are lane/sublane aligned
    # (the mask handles tail keys; padded query rows are sliced off).
    s_q_p = _round_up(s_q, _LANE)
    s_kv_p = _round_up(s_kv, _LANE)

    x_kv = x_key_value.astype(cdtype)
    x_q = x_query.astype(cdtype)
    if s_kv_p != s_kv:
        x_kv = jnp.pad(x_kv, ((0, 0), (0, s_kv_p - s_kv), (0, 0)))
    if s_q_p != s_q:
        x_q = jnp.pad(x_q, ((0, 0), (0, s_q_p - s_q), (0, 0)))

    wk_c = wk.astype(cdtype)
    wq_c = wq.astype(cdtype)
    wv_c = wv.astype(cdtype)

    mask_b = mask.astype(jnp.bool_)
    if s_kv_p != s_kv:
        mask_b = jnp.pad(mask_b, ((0, 0), (0, 0), (0, s_kv_p - s_kv)),
                         constant_values=False)     # padded keys get no attention
    if s_q_p != s_q:
        mask_b = jnp.pad(mask_b, ((0, 0), (0, s_q_p - s_q), (0, 0)),
                         constant_values=True)      # padded queries: finite, sliced off
    # TODO(synk): for structured (causal/padding) masks, synthesize in-kernel from
    # broadcasted_iota or bit-pack to 1 bit/score + kv-block skipping to cut the
    # dominant mask HBM term; arbitrary dense masks stay at 1 byte/score here.
    mask_i8 = mask_b.astype(jnp.int8)

    # ---- K/V projections (computed once, streamed into the flash kernel) ----
    ts_kv = _pick_proj_tile(s_kv_p, d_model, d_qk, d_v, c_item, budget)
    k_proj, v_proj = pl.pallas_call(
        _kv_proj_kernel,
        out_shape=(jax.ShapeDtypeStruct((n, s_kv_p, d_qk), cdtype),
                   jax.ShapeDtypeStruct((n, s_kv_p, d_v), cdtype)),
        grid=(n, s_kv_p // ts_kv),
        in_specs=[
            pl.BlockSpec((1, ts_kv, d_model), lambda b, i: (b, i, 0)),
            pl.BlockSpec((d_model, d_qk), lambda b, i: (0, 0)),
            pl.BlockSpec((d_model, d_v), lambda b, i: (0, 0)),
        ],
        out_specs=(pl.BlockSpec((1, ts_kv, d_qk), lambda b, i: (b, i, 0)),
                   pl.BlockSpec((1, ts_kv, d_v), lambda b, i: (b, i, 0))),
        compiler_params=pltpu.CompilerParams(
            dimension_semantics=("parallel", "parallel"),
            vmem_limit_bytes=vmem_limit),
        cost_estimate=pl.CostEstimate(
            flops=2 * n * s_kv_p * d_model * (d_qk + d_v),
            transcendentals=0,
            bytes_accessed=(n * s_kv_p * d_model + d_model * (d_qk + d_v)
                            + n * s_kv_p * (d_qk + d_v)) * c_item),
    )(x_kv, wk_c, wv_c)

    # ---- flash attention with fused Q projection -----------------------------
    tq, tk = _pick_flash_tiles(n, s_q_p, s_kv_p, d_model, d_qk, d_v, c_item, budget)
    n_q_tiles = s_q_p // tq
    exp_bf16 = bool(cdtype == jnp.bfloat16 and _supports_bf16_eup())

    flash = functools.partial(_flash_kernel, scale=scale, exp_bf16=exp_bf16)
    out_p = pl.pallas_call(
        flash,
        out_shape=jax.ShapeDtypeStruct((n, s_q_p, d_v), out_dtype),
        grid=(n, n_q_tiles, s_kv_p // tk),
        in_specs=[
            pl.BlockSpec((1, tq, tk), lambda b, qi, ki: (b, qi, ki)),      # mask
            pl.BlockSpec((1, tq, d_model), lambda b, qi, ki: (b, qi, 0)),  # x_query
            pl.BlockSpec((d_model, d_qk), lambda b, qi, ki: (0, 0)),       # wq (resident)
            pl.BlockSpec((1, tk, d_qk), lambda b, qi, ki: (b, ki, 0)),     # k
            pl.BlockSpec((1, tk, d_v), lambda b, qi, ki: (b, ki, 0)),      # v
        ],
        out_specs=pl.BlockSpec((1, tq, d_v), lambda b, qi, ki: (b, qi, 0)),
        scratch_shapes=[
            pltpu.VMEM((tq, d_qk), cdtype),        # fused-projected (scaled) q
            pltpu.VMEM((tq, 1), jnp.float32),      # running max  (m)
            pltpu.VMEM((tq, 1), jnp.float32),      # running sum  (l)
            pltpu.VMEM((tq, d_v), jnp.float32),    # output accumulator
        ],
        compiler_params=pltpu.CompilerParams(
            dimension_semantics=("parallel", "parallel", "arbitrary"),
            vmem_limit_bytes=vmem_limit),
        cost_estimate=pl.CostEstimate(
            flops=2 * n * s_q_p * (d_model * d_qk + s_kv_p * (d_qk + d_v)),
            transcendentals=n * s_q_p * s_kv_p,
            bytes_accessed=(n * s_q_p * s_kv_p                              # int8 mask
                            + n * s_q_p * d_model * c_item                  # x_q
                            + d_model * d_qk * c_item                       # wq
                            + n_q_tiles * n * s_kv_p * (d_qk + d_v) * c_item  # K/V re-fetch
                            + n * s_q_p * d_v * jnp.dtype(out_dtype).itemsize)),
    )(mask_i8, x_q, wq_c, k_proj, v_proj)

    return out_p[:, :s_q, :] if s_q_p != s_q else out_p


# --------------------------------------------------------------------------
# Pure-JAX reference (mirrors the PyTorch forward)
# --------------------------------------------------------------------------
def _reference(mask, x_key_value, wk, wq, wv, x_query=None):
    if x_query is None:
        x_query = x_key_value
    k = x_key_value @ wk
    q = x_query @ wq
    v = x_key_value @ wv
    mat = jnp.einsum("nik,njk->nij", q, k) / math.sqrt(wk.shape[1])
    mat = jnp.where(mask, mat, NEG_INF)
    p = jax.nn.softmax(mat, axis=2)
    return jnp.einsum("nij,njk->nik", p, v)


if __name__ == "__main__":
    N, S, D_MODEL, D_QK, D_V = 2, 8, 32, 16, 16

    key = jax.random.PRNGKey(0)
    k_x, k_wk, k_wq, k_wv, k_m = jax.random.split(key, 5)

    x_key_value = jax.random.normal(k_x, (N, S, D_MODEL), dtype=jnp.float32)

    # Module __init__ uses zeros; initialize with small random values so the
    # kernel does real work.
    wk = jax.random.normal(k_wk, (D_MODEL, D_QK), dtype=jnp.float32) * 0.1
    wq = jax.random.normal(k_wq, (D_MODEL, D_QK), dtype=jnp.float32) * 0.1
    wv = jax.random.normal(k_wv, (D_MODEL, D_V), dtype=jnp.float32) * 0.1

    # Boolean mask; at least one True per row (diagonal) so softmax is defined.
    rand_mask = jax.random.bernoulli(k_m, p=0.7, shape=(N, S, S))
    mask = jnp.logical_or(rand_mask, jnp.eye(S, dtype=jnp.bool_)[None, :, :])

    out = scaled_dot_product_attention(mask, x_key_value, wk, wq, wv)
    out = jax.block_until_ready(out)

    ref = _reference(mask, x_key_value, wk, wq, wv)
    assert out.shape == (N, S, D_V)
    assert jnp.allclose(out, ref, atol=1e-4, rtol=1e-4), "mismatch vs JAX reference"

    print("KERNEL_OK")
</pallas_src>

<mosaic_0001>
module attributes {stable_mosaic.version = 11 : i64} {
  func.func @_kv_proj_kernel(%arg0: i32, %arg1: i32, %arg2: memref<1x128x32xf32, #tpu.memory_space<vmem>>, %arg3: memref<32x16xf32, #tpu.memory_space<vmem>>, %arg4: memref<32x16xf32, #tpu.memory_space<vmem>>, %arg5: memref<1x128x16xf32, #tpu.memory_space<vmem>>, %arg6: memref<1x128x16xf32, #tpu.memory_space<vmem>>) attributes {dimension_semantics = [#tpu.dimension_semantics<parallel>, #tpu.dimension_semantics<parallel>], iteration_bounds = array<i64: 2, 1>, scalar_prefetch = 0 : i64, scratch_operands = 0 : i64, tpu.core_type = #tpu.core_type<tc>, window_params = [{transform_indices = @transform_0, window_bounds = array<i64: 1, 128, 32>}, {pipeline_mode = #tpu.pipeline_mode<synchronous>, transform_indices = @transform_1, window_bounds = array<i64: 32, 16>}, {pipeline_mode = #tpu.pipeline_mode<synchronous>, transform_indices = @transform_2, window_bounds = array<i64: 32, 16>}, {transform_indices = @transform_3, window_bounds = array<i64: 1, 128, 16>}, {transform_indices = @transform_4, window_bounds = array<i64: 1, 128, 16>}]} {
    %c0 = arith.constant 0 : index
    %c0_0 = arith.constant 0 : index
    %c0_1 = arith.constant 0 : index
    %0 = vector.load %arg2[%c0, %c0_0, %c0_1] : memref<1x128x32xf32, #tpu.memory_space<vmem>>, vector<1x128x32xf32>
    %1 = vector.shape_cast %0 : vector<1x128x32xf32> to vector<128x32xf32>
    %c0_2 = arith.constant 0 : index
    %c0_3 = arith.constant 0 : index
    %2 = vector.load %arg3[%c0_2, %c0_3] : memref<32x16xf32, #tpu.memory_space<vmem>>, vector<32x16xf32>
    %cst = arith.constant dense<0.000000e+00> : vector<128x16xf32>
    %3 = tpu.matmul %1, %2, %cst {dimension_numbers = #tpu.dot_dimension_numbers<[1], [0], [0], [1], [0, 0, 1, 1], [], []>} : vector<128x32xf32>, vector<32x16xf32>, vector<128x16xf32> -> vector<128x16xf32>
    %c0_4 = arith.constant 0 : index
    %c0_5 = arith.constant 0 : index
    %c0_6 = arith.constant 0 : index
    %4 = vector.load %arg5[%c0_4, %c0_5, %c0_6] : memref<1x128x16xf32, #tpu.memory_space<vmem>>, vector<1x128x16xf32>
    %5 = vector.shape_cast %4 : vector<1x128x16xf32> to vector<128x16xf32>
    %6 = vector.shape_cast %3 : vector<128x16xf32> to vector<1x128x16xf32>
    tpu.vector_store %arg5[%c0_4, %c0_5, %c0_6], %6 {strides = array<i32>} : memref<1x128x16xf32, #tpu.memory_space<vmem>>, vector<1x128x16xf32>,
    %c0_7 = arith.constant 0 : index
    %c0_8 = arith.constant 0 : index
    %7 = vector.load %arg4[%c0_7, %c0_8] : memref<32x16xf32, #tpu.memory_space<vmem>>, vector<32x16xf32>
    %cst_9 = arith.constant dense<0.000000e+00> : vector<128x16xf32>
    %8 = tpu.matmul %1, %7, %cst_9 {dimension_numbers = #tpu.dot_dimension_numbers<[1], [0], [0], [1], [0, 0, 1, 1], [], []>} : vector<128x32xf32>, vector<32x16xf32>, vector<128x16xf32> -> vector<128x16xf32>
    %c0_10 = arith.constant 0 : index
    %c0_11 = arith.constant 0 : index
    %c0_12 = arith.constant 0 : index
    %9 = vector.load %arg6[%c0_10, %c0_11, %c0_12] : memref<1x128x16xf32, #tpu.memory_space<vmem>>, vector<1x128x16xf32>
    %10 = vector.shape_cast %9 : vector<1x128x16xf32> to vector<128x16xf32>
    %11 = vector.shape_cast %8 : vector<128x16xf32> to vector<1x128x16xf32>
    tpu.vector_store %arg6[%c0_10, %c0_11, %c0_12], %11 {strides = array<i32>} : memref<1x128x16xf32, #tpu.memory_space<vmem>>, vector<1x128x16xf32>,
    return
  }
  func.func @transform_0(%arg0: i32, %arg1: i32) -> (i32, i32, i32) {
    %c0_i32 = arith.constant 0 : i32
    %c0_i32_0 = arith.constant 0 : i32
    return %arg0, %arg1, %c0_i32 : i32, i32, i32
  }
  func.func @transform_1(%arg0: i32, %arg1: i32) -> (i32, i32) {
    %c0_i32 = arith.constant 0 : i32
    %c0_i32_0 = arith.constant 0 : i32
    %c0_i32_1 = arith.constant 0 : i32
    return %c0_i32, %c0_i32_0 : i32, i32
  }
  func.func @transform_2(%arg0: i32, %arg1: i32) -> (i32, i32) {
    %c0_i32 = arith.constant 0 : i32
    %c0_i32_0 = arith.constant 0 : i32
    %c0_i32_1 = arith.constant 0 : i32
    return %c0_i32, %c0_i32_0 : i32, i32
  }
  func.func @transform_3(%arg0: i32, %arg1: i32) -> (i32, i32, i32) {
    %c0_i32 = arith.constant 0 : i32
    %c0_i32_0 = arith.constant 0 : i32
    return %arg0, %arg1, %c0_i32 : i32, i32, i32
  }
  func.func @transform_4(%arg0: i32, %arg1: i32) -> (i32, i32, i32) {
    %c0_i32 = arith.constant 0 : i32
    %c0_i32_0 = arith.constant 0 : i32
    return %arg0, %arg1, %c0_i32 : i32, i32, i32
  }
}

</mosaic_0001>

<llo_original>
// kernel: tpu_custom_call.1
$region0: #{tpu_custom_call.1}
  #allocation0 [shape = 'u32[]', space=smem, size = 0x4, offset = 0x4, fixed_abs, tag = 'smem constant byte address 0x4 - core index']
  #allocation1 [shape = 'u32[72,128]{1,0:T(1,128)}', space=vmem, size = 0x9000, scoped, tag = 'internal scratch']
  %s0 = inlined_call_operand.vmem [shape: f32[2,128,32], index: 0, kind: input, shape index: {}]
  %s1 = inlined_call_operand.vmem [shape: f32[32,16], index: 1, kind: input, shape index: {}]
  %s2 = inlined_call_operand.vmem [shape: f32[32,16], index: 2, kind: input, shape index: {}]
  %s3 = inlined_call_operand.vmem [shape: f32[2,128,16], index: 3, kind: output, shape index: {0}]
  %s4 = inlined_call_operand.vmem [shape: f32[2,128,16], index: 4, kind: output, shape index: {1}]
  %5 = xla_tuple %s3, %s4
  %s6 = sld [smem:[#allocation0]]
  $region53: #{tpu_custom_call.1} parent=0
    _
  %s8 = ssub.s32 1, %s6
  %s9 = scalar_select 0, %s8, %s6
  loop: start=0, step=1, limit=4
  $region2: #{tpu_custom_call.1} parent=0 // loop_pre_header
    _
  $region3: #{tpu_custom_call.1} parent=0 // loop_header
    %s11 = sphi 0, %s15
    %p12 = scmp.ge.s32.totalorder %s11, 4
    %s18 = sphi 0, %s30
    %s19 = sphi 0, %s26
    %s20 = sphi 0, %s18
    %s21 = sphi 0, %s19
    %s22 = sphi 0, %s20
    %s23 = sphi 0, %s21
    %s35 = sphi 0, %s37
    %s38 = sphi 0, %s35
    %s39 = sphi 0, %s38
    %s55 = sphi 0, %s39
    %s59 = sphi 0, %s59
    %s61 = sphi 0, %s59
    %s62 = sphi 0, %s61
    %s76 = sphi 0, %s62
    %s80 = sphi 0, %s80
    %s82 = sphi 0, %s80
    %s83 = sphi 0, %s82
    %s97 = sphi 0, %s83
    %s105 = sphi 0, %s107
    %s108 = sphi 0, %s105
    %s109 = sphi 0, %s108
    %s125 = sphi 0, %s109
    %s133 = sphi 0, %s135
    %s136 = sphi 0, %s133
    %s137 = sphi 0, %s136
    %s153 = sphi 0, %s137
  $region4: #{tpu_custom_call.1} parent=0 // loop_header_branch
    %14 = sbr.rel (%p12) target = $region8
  $region5: #{tpu_custom_call.1} parent=0 // loop_body
    %s16 = ssub.s32 %s11, 1
    %s17 = ssub.s32 %s11, 2
    %s24 = sadd.s32 1, %s19
    %p25 = scmp.ge.s32.totalorder %s24, 1
    %s26 = scalar_select %p25, 0, %s24
    %s27 = sadd.s32 1, %s18
    %s28 = scalar_select %p25, %s27, %s18
    %p29 = scmp.ge.s32.totalorder %s28, 2
    %s30 = scalar_select %p29, 0, %s28
    %s31 = ssub.s32 %s18, %s30
    %s32 = ssub.s32 %s19, %s26
    %s33 = sor.u32 %s31, %s32
    %p34 = scmp.eq.s32.totalorder %s33, 0
    %s36 = sadd.s32 %s35, 1
    %s37 = scalar_select %p34, %s35, %s36
    %p40 = pneg %p34
    %p41 = scmp.eq.s32.totalorder %s11, 1
    %p42 = por %p40, %p41
    %p43 = scmp.ne.s32.totalorder %s35, %s38
    %p44 = scmp.eq.s32.totalorder %s11, 0
    %p45 = por %p43, %p44
    %p46 = scmp.ne.s32.totalorder %s35, %s38
    %p47 = scmp.eq.s32.totalorder %s16, 1
    %p48 = por %p46, %p47
    %p49 = scmp.ne.s32.totalorder %s38, %s39
    %p50 = scmp.eq.s32.totalorder %s16, 0
    %p51 = por %p49, %p50
    %p52 = scmp.ne.s32.totalorder %s38, %s39
    %p53 = scmp.eq.s32.totalorder %s17, 1
    %p54 = por %p52, %p53
    %p56 = scmp.ne.s32.totalorder %s39, %s55
    %p57 = scmp.eq.s32.totalorder %s17, 0
    %p58 = por %p56, %p57
    %s60 = sadd.s32 %s59, 1
    %p63 = scmp.eq.s32.totalorder %s11, 1
    %p64 = scmp.ne.s32.totalorder %s59, %s61
    %p65 = scmp.eq.s32.totalorder %s11, 0
    %p66 = por %p64, %p65
    %p67 = scmp.ne.s32.totalorder %s59, %s61
    %p68 = scmp.eq.s32.totalorder %s16, 1
    %p69 = por %p67, %p68
    %p70 = scmp.ne.s32.totalorder %s61, %s62
    %p71 = scmp.eq.s32.totalorder %s16, 0
    %p72 = por %p70, %p71
    %p73 = scmp.ne.s32.totalorder %s61, %s62
    %p74 = scmp.eq.s32.totalorder %s17, 1
    %p75 = por %p73, %p74
    %p77 = scmp.ne.s32.totalorder %s62, %s76
    %p78 = scmp.eq.s32.totalorder %s17, 0
    %p79 = por %p77, %p78
    %s81 = sadd.s32 %s80, 1
    %p84 = scmp.eq.s32.totalorder %s11, 1
    %p85 = scmp.ne.s32.totalorder %s80, %s82
    %p86 = scmp.eq.s32.totalorder %s11, 0
    %p87 = por %p85, %p86
    %p88 = scmp.ne.s32.totalorder %s80, %s82
    %p89 = scmp.eq.s32.totalorder %s16, 1
    %p90 = por %p88, %p89
    %p91 = scmp.ne.s32.totalorder %s82, %s83
    %p92 = scmp.eq.s32.totalorder %s16, 0
    %p93 = por %p91, %p92
    %p94 = scmp.ne.s32.totalorder %s82, %s83
    %p95 = scmp.eq.s32.totalorder %s17, 1
    %p96 = por %p94, %p95
    %p98 = scmp.ne.s32.totalorder %s83, %s97
    %p99 = scmp.eq.s32.totalorder %s17, 0
    %p100 = por %p98, %p99
    %s101 = ssub.s32 %s18, %s30
    %s102 = ssub.s32 %s19, %s26
    %s103 = sor.u32 %s101, %s102
    %p104 = scmp.eq.s32.totalorder %s103, 0
    %s106 = sadd.s32 %s105, 1
    %s107 = scalar_select %p104, %s105, %s106
    %p110 = pneg %p104
    %p111 = scmp.eq.s32.totalorder %s11, 1
    %p112 = por %p110, %p111
    %p113 = scmp.ne.s32.totalorder %s105, %s108
    %p114 = scmp.eq.s32.totalorder %s11, 0
    %p115 = por %p113, %p114
    %p116 = scmp.ne.s32.totalorder %s105, %s108
    %p117 = scmp.eq.s32.totalorder %s16, 1
    %p118 = por %p116, %p117
    %p119 = scmp.ne.s32.totalorder %s108, %s109
    %p120 = scmp.eq.s32.totalorder %s16, 0
    %p121 = por %p119, %p120
    %p122 = scmp.ne.s32.totalorder %s108, %s109
    %p123 = scmp.eq.s32.totalorder %s17, 1
    %p124 = por %p122, %p123
    %p126 = scmp.ne.s32.totalorder %s109, %s125
    %p127 = scmp.eq.s32.totalorder %s17, 0
    %p128 = por %p126, %p127
    %s129 = ssub.s32 %s18, %s30
    %s130 = ssub.s32 %s19, %s26
    %s131 = sor.u32 %s129, %s130
    %p132 = scmp.eq.s32.totalorder %s131, 0
    %s134 = sadd.s32 %s133, 1
    %s135 = scalar_select %p132, %s133, %s134
    %p138 = pneg %p132
    %p139 = scmp.eq.s32.totalorder %s11, 1
    %p140 = por %p138, %p139
    %p141 = scmp.ne.s32.totalorder %s133, %s136
    %p142 = scmp.eq.s32.totalorder %s11, 0
    %p143 = por %p141, %p142
    %p144 = scmp.ne.s32.totalorder %s133, %s136
    %p145 = scmp.eq.s32.totalorder %s16, 1
    %p146 = por %p144, %p145
    %p147 = scmp.ne.s32.totalorder %s136, %s137
    %p148 = scmp.eq.s32.totalorder %s16, 0
    %p149 = por %p147, %p148
    %p150 = scmp.ne.s32.totalorder %s136, %s137
    %p151 = scmp.eq.s32.totalorder %s17, 1
    %p152 = por %p150, %p151
    %p154 = scmp.ne.s32.totalorder %s137, %s153
    %p155 = scmp.eq.s32.totalorder %s17, 0
    %p156 = por %p154, %p155
    %p157 = scmp.le.s32.totalorder 1, %s11
    %p158 = scmp.lt.s32.totalorder %s11, 3
    %p159 = pnand %p157, %p158
    %p160 = pneg %p159
    // Predicated region
    $region9: #{tpu_custom_call.1} parent=5 // pred_check
      _
    $region10: #{tpu_custom_call.1} parent=5 // pred_check_branch
      %162 = sbr.rel (%p159) target = $region12
    $region11: #{tpu_custom_call.1} parent=5 // pred_region
      %s163 = ssub.s32 %s11, 1
      // Predicated region
      $region13: #{tpu_custom_call.1} parent=11 // pred_check
        %p164 = pneg %p72
      $region14: #{tpu_custom_call.1} parent=11 // pred_check_branch
        %166 = sbr.rel (%p164) target = $region16
      $region15: #{tpu_custom_call.1} parent=11 // pred_region
        _
      $region16: #{tpu_custom_call.1} parent=11 // pred_fallthru
        _
      // Predicated region
      $region17: #{tpu_custom_call.1} parent=11 // pred_check
        %p167 = pneg %p93
      $region18: #{tpu_custom_call.1} parent=11 // pred_check_branch
        %169 = sbr.rel (%p167) target = $region20
      $region19: #{tpu_custom_call.1} parent=11 // pred_region
        _
      $region20: #{tpu_custom_call.1} parent=11 // pred_fallthru
        _
    $region12: #{tpu_custom_call.1} parent=5 // pred_fallthru
      _
    %p170 = scmp.lt.s32.totalorder %s11, 2
    // Predicated region
    $region21: #{tpu_custom_call.1} parent=5 // pred_check
      %p171 = pneg %p170
    $region22: #{tpu_custom_call.1} parent=5 // pred_check_branch
      %173 = sbr.rel (%p171) target = $region24
    $region23: #{tpu_custom_call.1} parent=5 // pred_region
      // Predicated region
      $region25: #{tpu_custom_call.1} parent=23 // pred_check
        %p174 = pneg %p45
      $region26: #{tpu_custom_call.1} parent=23 // pred_check_branch
        %176 = sbr.rel (%p174) target = $region28
      $region27: #{tpu_custom_call.1} parent=23 // pred_region
        %s177 = smul.u32 16, %s19
        %p178 = scmp.lt.s32.totalorder %s18, 1
        %s179 = scalar_select %p178, %s18, 1
        %p180 = scmp.lt.s32.totalorder %s177, 15
        %s181 = scalar_select %p180, %s177, 15
        %s182 = smul.addr %s179, 16
        %s183 = sadd.s32 %s181, %s182
        %s184 = smul.addr %s183, 8
        %s185 = scalar_lea.vmem %s0, %s184
        %s186 = smul.u32 16, %s19
      $region28: #{tpu_custom_call.1} parent=23 // pred_fallthru
        _
    $region24: #{tpu_custom_call.1} parent=5 // pred_fallthru
      _
    %p187 = scmp.le.s32.totalorder 1, %s11
    %p188 = scmp.lt.s32.totalorder %s11, 3
    %p189 = pnand %p187, %p188
    %p190 = pneg %p189
    // Predicated region
    $region29: #{tpu_custom_call.1} parent=5 // pred_check
      _
    $region30: #{tpu_custom_call.1} parent=5 // pred_check_branch
      %192 = sbr.rel (%p189) target = $region32
    $region31: #{tpu_custom_call.1} parent=5 // pred_region
      %s193 = ssub.s32 %s11, 1
      %s194 = smul.u32 16, %s21
      %p195 = scmp.lt.s32.totalorder %s20, 1
      %s196 = scalar_select %p195, %s20, 1
      %p197 = scmp.lt.s32.totalorder %s194, 15
      %s198 = scalar_select %p197, %s194, 15
      %s199 = smul.addr %s196, 16
      %s200 = sadd.s32 %s198, %s199
      %s201 = smul.addr %s200, 8
      %s202 = scalar_lea.vmem %s0, %s201
      %p203 = pneg %p51
      %p204 = pneg %p48
      %p205 = pneg %p72
      %p206 = pneg %p69
      %p207 = pneg %p93
      %p208 = pneg %p90
      %p209 = pneg %p121
      %p210 = pneg %p118
      %s211 = smul.u32 16, %s21
      %p212 = scmp.lt.s32.totalorder %s20, 1
      %s213 = scalar_select %p212, %s20, 1
      %p214 = scmp.lt.s32.totalorder %s211, 15
      %s215 = scalar_select %p214, %s211, 15
      %s216 = smul.addr %s213, 16
      %s217 = sadd.s32 %s215, %s216
      %s218 = smul.addr %s217, 8
      %s219 = scalar_lea.vmem %s3, %s218
      %p220 = pneg %p149
      %p221 = pneg %p146
      %s222 = smul.u32 16, %s21
      %p223 = scmp.lt.s32.totalorder %s20, 1
      %s224 = scalar_select %p223, %s20, 1
      %p225 = scmp.lt.s32.totalorder %s222, 15
      %s226 = scalar_select %p225, %s222, 15
      %s227 = smul.addr %s224, 16
      %s228 = sadd.s32 %s226, %s227
      %s229 = smul.addr %s228, 8
      %s230 = scalar_lea.vmem %s4, %s229
      %s231 = smul.u32 16, %s21
      %p232 = scmp.lt.s32.totalorder %s20, 1
      %s233 = scalar_select %p232, %s20, 1
      %p234 = scmp.lt.s32.totalorder %s231, 15
      %s235 = scalar_select %p234, %s231, 15
      %s236 = smul.addr %s233, 16
      %s237 = sadd.s32 %s235, %s236
      %s238 = smul.addr %s237, 8
      %s239 = scalar_lea.vmem %s0, %s238
      %s240 = smul.u32 16, %s21
      %s241 = smul.u32 16, %s21
      %p242 = scmp.lt.s32.totalorder %s20, 1
      %s243 = scalar_select %p242, %s20, 1
      %p244 = scmp.lt.s32.totalorder %s241, 15
      %s245 = scalar_select %p244, %s241, 15
      %s246 = smul.addr %s243, 16
      %s247 = sadd.s32 %s245, %s246
      %s248 = smul.addr %s247, 8
      %s249 = scalar_lea.vmem %s3, %s248
      %s250 = smul.u32 16, %s21
      %s251 = smul.u32 16, %s21
      %p252 = scmp.lt.s32.totalorder %s20, 1
      %s253 = scalar_select %p252, %s20, 1
      %p254 = scmp.lt.s32.totalorder %s251, 15
      %s255 = scalar_select %p254, %s251, 15
      %s256 = smul.addr %s253, 16
      %s257 = sadd.s32 %s255, %s256
      %s258 = smul.addr %s257, 8
      %s259 = scalar_lea.vmem %s4, %s258
      %s260 = smul.u32 16, %s21
      %v261 = vld [vmem:[%s239] sm:$0xff]
      %v262 = vld [vmem:[%s239 + $0x8] sm:$0xff]
      %v263 = vld [vmem:[%s239 + $0x10] sm:$0xff]
      %v264 = vld [vmem:[%s239 + $0x18] sm:$0xff]
      %v265 = vld [vmem:[%s239 + $0x20] sm:$0xff]
      %v266 = vld [vmem:[%s239 + $0x28] sm:$0xff]
      %v267 = vld [vmem:[%s239 + $0x30] sm:$0xff]
      %v268 = vld [vmem:[%s239 + $0x38] sm:$0xff]
      %v269 = vld [vmem:[%s239 + $0x40] sm:$0xff]
      %v270 = vld [vmem:[%s239 + $0x48] sm:$0xff]
      %v271 = vld [vmem:[%s239 + $0x50] sm:$0xff]
      %v272 = vld [vmem:[%s239 + $0x58] sm:$0xff]
      %v273 = vld [vmem:[%s239 + $0x60] sm:$0xff]
      %v274 = vld [vmem:[%s239 + $0x68] sm:$0xff]
      %v275 = vld [vmem:[%s239 + $0x70] sm:$0xff]
      %v276 = vld [vmem:[%s239 + $0x78] sm:$0xff]
      %v277 = vld [vmem:[%s1] sm:$0xff]
      %v278 = vld [vmem:[%s1 + $0x8] sm:$0xff]
      %v279 = vld [vmem:[%s1 + $0x10] sm:$0xff]
      %v280 = vld [vmem:[%s1 + $0x18] sm:$0xff]
      %vm281 = vcmask 261120
      %v283 = vsel %vm281, %v261, 0
      %v286 = vsel %vm281, %v262, 0
      %v289 = vsel %vm281, %v263, 0
      %v292 = vsel %vm281, %v264, 0
      %v295 = vsel %vm281, %v265, 0
      %v298 = vsel %vm281, %v266, 0
      %v301 = vsel %vm281, %v267, 0
      %v304 = vsel %vm281, %v268, 0
      %v307 = vsel %vm281, %v269, 0
      %v310 = vsel %vm281, %v270, 0
      %v313 = vsel %vm281, %v271, 0
      %v316 = vsel %vm281, %v272, 0
      %v319 = vsel %vm281, %v273, 0
      %v322 = vsel %vm281, %v274, 0
      %v325 = vsel %vm281, %v275, 0
      %v328 = vsel %vm281, %v276, 0
      %330 = vmatpush.msra.mxu0 0.0
      %331 = vmatpush.msra.mxu0 0.0
      %332 = vmatpush.msra.mxu0 0.0
      %333 = vmatpush.msra.mxu0 0.0
      %334 = vmatpush.msra.mxu0 0.0
      %335 = vmatpush.msra.mxu0 0.0
      %336 = vmatpush.msra.mxu0 0.0
      %337 = vmatpush.msra.mxu0 0.0
      %338 = vmatpush.msra.mxu0 0.0
      %339 = vmatpush.msra.mxu0 0.0
      %340 = vmatpush.msra.mxu0 0.0
      %341 = vmatpush.msra.mxu0 0.0
      %342 = vmatpush.msra.mxu0 %v280
      %343 = vmatpush.msra.mxu0 %v279
      %344 = vmatpush.msra.mxu0 %v278
      %345 = vmatpush.msra.mxu0 %v277
      %346 = vmatmul.f32.gmra.mxu0 %v283
      %v347 = vpop.f32.mrf.mxu0
      %v348 = vadd.f32 0.0, %v347
      %349 = vmatmul.f32.gmra.mxu0 %v286
      %v350 = vpop.f32.mrf.mxu0
      %v351 = vadd.f32 0.0, %v350
      %352 = vmatmul.f32.gmra.mxu0 %v289
      %v353 = vpop.f32.mrf.mxu0
      %v354 = vadd.f32 0.0, %v353
      %355 = vmatmul.f32.gmra.mxu0 %v292
      %v356 = vpop.f32.mrf.mxu0
      %v357 = vadd.f32 0.0, %v356
      %358 = vmatmul.f32.gmra.mxu0 %v295
      %v359 = vpop.f32.mrf.mxu0
      %v360 = vadd.f32 0.0, %v359
      %361 = vmatmul.f32.gmra.mxu0 %v298
      %v362 = vpop.f32.mrf.mxu0
      %v363 = vadd.f32 0.0, %v362
      %364 = vmatmul.f32.gmra.mxu0 %v301
      %v365 = vpop.f32.mrf.mxu0
      %v366 = vadd.f32 0.0, %v365
      %367 = vmatmul.f32.gmra.mxu0 %v304
      %v368 = vpop.f32.mrf.mxu0
      %v369 = vadd.f32 0.0, %v368
      %370 = vmatmul.f32.gmra.mxu0 %v307
      %v371 = vpop.f32.mrf.mxu0
      %v372 = vadd.f32 0.0, %v371
      %373 = vmatmul.f32.gmra.mxu0 %v310
      %v374 = vpop.f32.mrf.mxu0
      %v375 = vadd.f32 0.0, %v374
      %376 = vmatmul.f32.gmra.mxu0 %v313
      %v377 = vpop.f32.mrf.mxu0
      %v378 = vadd.f32 0.0, %v377
      %379 = vmatmul.f32.gmra.mxu0 %v316
      %v380 = vpop.f32.mrf.mxu0
      %v381 = vadd.f32 0.0, %v380
      %382 = vmatmul.f32.gmra.mxu0 %v319
      %v383 = vpop.f32.mrf.mxu0
      %v384 = vadd.f32 0.0, %v383
      %385 = vmatmul.f32.gmra.mxu0 %v322
      %v386 = vpop.f32.mrf.mxu0
      %v387 = vadd.f32 0.0, %v386
      %388 = vmatmul.f32.gmra.mxu0 %v325
      %v389 = vpop.f32.mrf.mxu0
      %v390 = vadd.f32 0.0, %v389
      %391 = vmatmul.f32.gmra.mxu0 %v328
      %v392 = vpop.f32.mrf.mxu0
      %v393 = vadd.f32 0.0, %v392
      %394 = vdwg.mxu0
      %vm395 = vcmask 130048
      %396 = vst.msk [vmem:[%s249] sm:$0xff] %vm395, %v348
      %397 = vst.msk [vmem:[%s249 + $0x8] sm:$0xff] %vm395, %v351
      %398 = vst.msk [vmem:[%s249 + $0x10] sm:$0xff] %vm395, %v354
      %399 = vst.msk [vmem:[%s249 + $0x18] sm:$0xff] %vm395, %v357
      %400 = vst.msk [vmem:[%s249 + $0x20] sm:$0xff] %vm395, %v360
      %401 = vst.msk [vmem:[%s249 + $0x28] sm:$0xff] %vm395, %v363
      %402 = vst.msk [vmem:[%s249 + $0x30] sm:$0xff] %vm395, %v366
      %403 = vst.msk [vmem:[%s249 + $0x38] sm:$0xff] %vm395, %v369
      %404 = vst.msk [vmem:[%s249 + $0x40] sm:$0xff] %vm395, %v372
      %405 = vst.msk [vmem:[%s249 + $0x48] sm:$0xff] %vm395, %v375
      %406 = vst.msk [vmem:[%s249 + $0x50] sm:$0xff] %vm395, %v378
      %407 = vst.msk [vmem:[%s249 + $0x58] sm:$0xff] %vm395, %v381
      %408 = vst.msk [vmem:[%s249 + $0x60] sm:$0xff] %vm395, %v384
      %409 = vst.msk [vmem:[%s249 + $0x68] sm:$0xff] %vm395, %v387
      %410 = vst.msk [vmem:[%s249 + $0x70] sm:$0xff] %vm395, %v390
      %411 = vst.msk [vmem:[%s249 + $0x78] sm:$0xff] %vm395, %v393
      %v412 = vld [vmem:[%s2] sm:$0xff]
      %v413 = vld [vmem:[%s2 + $0x8] sm:$0xff]
      %v414 = vld [vmem:[%s2 + $0x10] sm:$0xff]
      %v415 = vld [vmem:[%s2 + $0x18] sm:$0xff]
      %416 = vmatpush.msra.mxu0 0.0
      %417 = vmatpush.msra.mxu0 0.0
      %418 = vmatpush.msra.mxu0 0.0
      %419 = vmatpush.msra.mxu0 0.0
      %420 = vmatpush.msra.mxu0 0.0
      %421 = vmatpush.msra.mxu0 0.0
      %422 = vmatpush.msra.mxu0 0.0
      %423 = vmatpush.msra.mxu0 0.0
      %424 = vmatpush.msra.mxu0 0.0
      %425 = vmatpush.msra.mxu0 0.0
      %426 = vmatpush.msra.mxu0 0.0
      %427 = vmatpush.msra.mxu0 0.0
      %428 = vmatpush.msra.mxu0 %v415
      %429 = vmatpush.msra.mxu0 %v414
      %430 = vmatpush.msra.mxu0 %v413
      %431 = vmatpush.msra.mxu0 %v412
      %432 = vmatmul.f32.gmra.mxu0 %v283
      %v433 = vpop.f32.mrf.mxu0
      %v434 = vadd.f32 0.0, %v433
      %435 = vmatmul.f32.gmra.mxu0 %v286
      %v436 = vpop.f32.mrf.mxu0
      %v437 = vadd.f32 0.0, %v436
      %438 = vmatmul.f32.gmra.mxu0 %v289
      %v439 = vpop.f32.mrf.mxu0
      %v440 = vadd.f32 0.0, %v439
      %441 = vmatmul.f32.gmra.mxu0 %v292
      %v442 = vpop.f32.mrf.mxu0
      %v443 = vadd.f32 0.0, %v442
      %444 = vmatmul.f32.gmra.mxu0 %v295
      %v445 = vpop.f32.mrf.mxu0
      %v446 = vadd.f32 0.0, %v445
      %447 = vmatmul.f32.gmra.mxu0 %v298
      %v448 = vpop.f32.mrf.mxu0
      %v449 = vadd.f32 0.0, %v448
      %450 = vmatmul.f32.gmra.mxu0 %v301
      %v451 = vpop.f32.mrf.mxu0
      %v452 = vadd.f32 0.0, %v451
      %453 = vmatmul.f32.gmra.mxu0 %v304
      %v454 = vpop.f32.mrf.mxu0
      %v455 = vadd.f32 0.0, %v454
      %456 = vmatmul.f32.gmra.mxu0 %v307
      %v457 = vpop.f32.mrf.mxu0
      %v458 = vadd.f32 0.0, %v457
      %459 = vmatmul.f32.gmra.mxu0 %v310
      %v460 = vpop.f32.mrf.mxu0
      %v461 = vadd.f32 0.0, %v460
      %462 = vmatmul.f32.gmra.mxu0 %v313
      %v463 = vpop.f32.mrf.mxu0
      %v464 = vadd.f32 0.0, %v463
      %465 = vmatmul.f32.gmra.mxu0 %v316
      %v466 = vpop.f32.mrf.mxu0
      %v467 = vadd.f32 0.0, %v466
      %468 = vmatmul.f32.gmra.mxu0 %v319
      %v469 = vpop.f32.mrf.mxu0
      %v470 = vadd.f32 0.0, %v469
      %471 = vmatmul.f32.gmra.mxu0 %v322
      %v472 = vpop.f32.mrf.mxu0
      %v473 = vadd.f32 0.0, %v472
      %474 = vmatmul.f32.gmra.mxu0 %v325
      %v475 = vpop.f32.mrf.mxu0
      %v476 = vadd.f32 0.0, %v475
      %477 = vmatmul.f32.gmra.mxu0 %v328
      %v478 = vpop.f32.mrf.mxu0
      %v479 = vadd.f32 0.0, %v478
      %480 = vdwg.mxu0
      %481 = vst.msk [vmem:[%s259] sm:$0xff] %vm395, %v434
      %482 = vst.msk [vmem:[%s259 + $0x8] sm:$0xff] %vm395, %v437
      %483 = vst.msk [vmem:[%s259 + $0x10] sm:$0xff] %vm395, %v440
      %484 = vst.msk [vmem:[%s259 + $0x18] sm:$0xff] %vm395, %v443
      %485 = vst.msk [vmem:[%s259 + $0x20] sm:$0xff] %vm395, %v446
      %486 = vst.msk [vmem:[%s259 + $0x28] sm:$0xff] %vm395, %v449
      %487 = vst.msk [vmem:[%s259 + $0x30] sm:$0xff] %vm395, %v452
      %488 = vst.msk [vmem:[%s259 + $0x38] sm:$0xff] %vm395, %v455
      %489 = vst.msk [vmem:[%s259 + $0x40] sm:$0xff] %vm395, %v458
      %490 = vst.msk [vmem:[%s259 + $0x48] sm:$0xff] %vm395, %v461
      %491 = vst.msk [vmem:[%s259 + $0x50] sm:$0xff] %vm395, %v464
      %492 = vst.msk [vmem:[%s259 + $0x58] sm:$0xff] %vm395, %v467
      %493 = vst.msk [vmem:[%s259 + $0x60] sm:$0xff] %vm395, %v470
      %494 = vst.msk [vmem:[%s259 + $0x68] sm:$0xff] %vm395, %v473
      %495 = vst.msk [vmem:[%s259 + $0x70] sm:$0xff] %vm395, %v476
      %496 = vst.msk [vmem:[%s259 + $0x78] sm:$0xff] %vm395, %v479
      %s497 = smul.u32 16, %s21
      %p498 = scmp.lt.s32.totalorder %s20, 1
      %s499 = scalar_select %p498, %s20, 1
      %p500 = scmp.lt.s32.totalorder %s497, 15
      %s501 = scalar_select %p500, %s497, 15
      %s502 = smul.addr %s499, 16
      %s503 = sadd.s32 %s501, %s502
      %s504 = smul.addr %s503, 8
      %s505 = scalar_lea.vmem %s3, %s504
      %s506 = smul.u32 16, %s21
      %p507 = scmp.lt.s32.totalorder %s20, 1
      %s508 = scalar_select %p507, %s20, 1
      %p509 = scmp.lt.s32.totalorder %s506, 15
      %s510 = scalar_select %p509, %s506, 15
      %s511 = smul.addr %s508, 16
      %s512 = sadd.s32 %s510, %s511
      %s513 = smul.addr %s512, 8
      %s514 = scalar_lea.vmem %s4, %s513
      // Predicated region
      $region33: #{tpu_custom_call.1} parent=31 // pred_check
        %p515 = pneg %p118
      $region34: #{tpu_custom_call.1} parent=31 // pred_check_branch
        %517 = sbr.rel (%p515) target = $region36
      $region35: #{tpu_custom_call.1} parent=31 // pred_region
        %s518 = smul.u32 16, %s21
      $region36: #{tpu_custom_call.1} parent=31 // pred_fallthru
        _
      // Predicated region
      $region37: #{tpu_custom_call.1} parent=31 // pred_check
        %p519 = pneg %p146
      $region38: #{tpu_custom_call.1} parent=31 // pred_check_branch
        %521 = sbr.rel (%p519) target = $region40
      $region39: #{tpu_custom_call.1} parent=31 // pred_region
        %s522 = smul.u32 16, %s21
      $region40: #{tpu_custom_call.1} parent=31 // pred_fallthru
        _
    $region32: #{tpu_custom_call.1} parent=5 // pred_fallthru
      _
    %p523 = scmp.le.s32.totalorder 2, %s11
    // Predicated region
    $region41: #{tpu_custom_call.1} parent=5 // pred_check
      %p524 = pneg %p523
    $region42: #{tpu_custom_call.1} parent=5 // pred_check_branch
      %526 = sbr.rel (%p524) target = $region44
    $region43: #{tpu_custom_call.1} parent=5 // pred_region
      %s527 = ssub.s32 %s11, 2
      // Predicated region
      $region45: #{tpu_custom_call.1} parent=43 // pred_check
        %p528 = pneg %p124
      $region46: #{tpu_custom_call.1} parent=43 // pred_check_branch
        %530 = sbr.rel (%p528) target = $region48
      $region47: #{tpu_custom_call.1} parent=43 // pred_region
        %s531 = smul.u32 16, %s23
        %p532 = scmp.lt.s32.totalorder %s22, 1
        %s533 = scalar_select %p532, %s22, 1
        %p534 = scmp.lt.s32.totalorder %s531, 15
        %s535 = scalar_select %p534, %s531, 15
        %s536 = smul.addr %s533, 16
        %s537 = sadd.s32 %s535, %s536
        %s538 = smul.addr %s537, 8
        %s539 = scalar_lea.vmem %s3, %s538
      $region48: #{tpu_custom_call.1} parent=43 // pred_fallthru
        _
      // Predicated region
      $region49: #{tpu_custom_call.1} parent=43 // pred_check
        %p540 = pneg %p152
      $region50: #{tpu_custom_call.1} parent=43 // pred_check_branch
        %542 = sbr.rel (%p540) target = $region52
      $region51: #{tpu_custom_call.1} parent=43 // pred_region
        %s543 = smul.u32 16, %s23
        %p544 = scmp.lt.s32.totalorder %s22, 1
        %s545 = scalar_select %p544, %s22, 1
        %p546 = scmp.lt.s32.totalorder %s543, 15
        %s547 = scalar_select %p546, %s543, 15
        %s548 = smul.addr %s545, 16
        %s549 = sadd.s32 %s547, %s548
        %s550 = smul.addr %s549, 8
        %s551 = scalar_lea.vmem %s4, %s550
      $region52: #{tpu_custom_call.1} parent=43 // pred_fallthru
        _
    $region44: #{tpu_custom_call.1} parent=5 // pred_fallthru
      _
  $region6: #{tpu_custom_call.1} parent=0 // loop_footer
    %s15 = sadd.s32 1, %s11
  $region7: #{tpu_custom_call.1} parent=0 // loop_footer_branch
    %10 = sbr.rel target = $region3
  $region8: #{tpu_custom_call.1} parent=0 // loop_exit
    _

</llo_original>
